<compile_context>
chip_gen: v5e
topology: v5e:2x2
jax: 0.10.0
libtpu: 0.0.40
codegen_flags: <defaults>
</compile_context>

<pallas_src>
import functools
import math

import jax
import jax.numpy as jnp
from jax import lax
from jax.experimental import pallas as pl
from jax.experimental.pallas import tpu as pltpu


def _angular_kernel(xa_ref, xp_ref, xn_ref, la_ref, lp_ref, ln_ref,
                    out_ref, s_acc, w_cache, *, c4, c2, tm, tn):
    # Grid indices read ONLY at top level (never inside pl.when bodies).
    i = pl.program_id(0)
    j = pl.program_id(1)
    k = pl.program_id(2)
    nk = pl.num_programs(2)

    # Output block index depends only on i -> VMEM-resident across (j, k); use it
    # directly as the per-anchor accumulator (no row_acc scratch).
    @pl.when(jnp.logical_and(j == 0, k == 0))
    def _():
        out_ref[...] = jnp.zeros_like(out_ref)

    # (tm, tn) accumulator for S[a,p] over the n-contraction axis.
    @pl.when(k == 0)
    def _():
        s_acc[...] = jnp.zeros_like(s_acc)

    la = la_ref[...]                       # (tm, 1) int32, -1 = padding
    xp = xp_ref[...]                       # (tn, d) bf16
    xn = xn_ref[...]                       # (tk, d) bf16

    # w[a,n] = negmask * exp(c4*(sim_an - 1)) depends only on (i, k): compute once per
    # anchor tile (j == 0), cache in bf16 VMEM, reuse for every positive tile j > 0.
    @pl.when(j == 0)
    def _():
        ln = ln_ref[...]                   # (1, tk) int32
        sim_an = lax.dot_general(xa_ref[...], xn, (((1,), (1,)), ((), ())),
                                 preferred_element_type=jnp.float32)      # (tm, tk)
        neg = jnp.logical_and(la != ln, jnp.logical_and(la >= 0, ln >= 0))
        w = jnp.where(neg, jnp.exp(c4 * (sim_an - 1.0)), 0.0)
        w_cache[k] = w.astype(jnp.bfloat16)

    w = w_cache[k]                                                        # (tm, tk)

    sim_pn = lax.dot_general(xp, xn, (((1,), (1,)), ((), ())),
                             preferred_element_type=jnp.float32)          # (tn, tk)
    e4p = jnp.exp(c4 * (sim_pn - 1.0)).astype(jnp.bfloat16)               # (tn, tk)

    # S[a,p] += sum_n w[a,n] * e4p[p,n]  (bf16 MXU contraction, f32 accumulation)
    s_acc[...] += lax.dot_general(w, e4p, (((1,), (1,)), ((), ())),
                                  preferred_element_type=jnp.float32)     # (tm, tn)

    @pl.when(k == nk - 1)
    def _():
        lp = lp_ref[...]                                                  # (1, tn)
        sim_ap = lax.dot_general(xa_ref[...], xp, (((1,), (1,)), ((), ())),
                                 preferred_element_type=jnp.float32)      # (tm, tn)
        ga = i * tm + lax.broadcasted_iota(jnp.int32, (tm, tn), 0)
        gp = j * tn + lax.broadcasted_iota(jnp.int32, (tm, tn), 1)
        pos = jnp.logical_and(la == lp,
                              jnp.logical_and(la >= 0, ga != gp))         # (tm, tn)
        contrib = jnp.where(pos, jnp.exp(-c2 * (sim_ap + 1.0)) * s_acc[...], 0.0)
        out_ref[...] += jnp.sum(contrib, axis=1, keepdims=True)           # (tm, 1)


def _round_up(x, m):
    return (x + m - 1) // m * m


def angular_loss(embeds, labels, margin=45.0, normalize_embeds=True, tile=256):
    """AngularLoss forward (all-triplets mining), Pallas TPU kernel."""
    x = embeds.astype(jnp.float32)
    if normalize_embeds:
        # F.normalize(p=2, dim=1, eps=1e-12) — O(N*D) glue kept in the wrapper.
        norm = jnp.sqrt(jnp.sum(x * x, axis=1, keepdims=True))
        x = x / jnp.maximum(norm, 1e-12)

    n, d = x.shape
    t2 = math.tan(math.radians(float(margin))) ** 2
    c4 = 4.0 * t2
    c2 = 2.0 * (1.0 + t2)
    shift = 2.0 * c4 + c2        # max possible exponent since sims are in [-1, 1]

    if n <= tile:
        # bf16 operands pack along sublanes -> pad rows to a multiple of 16.
        n_pad = _round_up(max(n, 16), 16)
        tm = tn = tk = n_pad                   # single tile; x fetched exactly once
    else:
        n_pad = _round_up(n, tile)
        tm = tn = tk = tile

    labels_i = labels.astype(jnp.int32)
    if n_pad != n:
        x = jnp.pad(x, ((0, n_pad - n), (0, 0)))
        labels_i = jnp.pad(labels_i, (0, n_pad - n), constant_values=-1)

    x_bf16 = x.astype(jnp.bfloat16)            # bf16 MXU operands, half HBM/VMEM
    labels_col = labels_i.reshape(n_pad, 1)    # anchor labels (sublane layout)
    labels_row = labels_i.reshape(1, n_pad)    # positive/negative labels (lane layout)

    ni, nj, nk = n_pad // tm, n_pad // tn, n_pad // tk
    grid = (ni, nj, nk)

    kernel = functools.partial(_angular_kernel, c4=c4, c2=c2, tm=tm, tn=tn)

    # Explicit VMEM budget (double-buffered input blocks + scratch + temporaries),
    # capped at 64 MiB so it never exceeds v7x physical VMEM.
    blk = 2 * 2 * (tm + tn + tk) * d                     # bf16 x blocks, double-buffered
    lbl = 2 * 4 * (tm + tn + tk)                         # int32 label blocks
    outb = 2 * 4 * tm                                    # f32 output block
    scr = 4 * tm * tn + 2 * nk * tm * tk                 # s_acc + w cache
    tmp = 4 * (2 * tn * tk + 3 * tm * tn + 2 * tm * tk)  # in-kernel temporaries
    est = blk + lbl + outb + scr + tmp
    vmem_limit = int(min(64 * 1024 * 1024, max(32 * 1024 * 1024, 2 * est)))

    per_anchor = pl.pallas_call(
        kernel,
        out_shape=jax.ShapeDtypeStruct((n_pad, 1), jnp.float32),
        grid_spec=pltpu.PrefetchScalarGridSpec(
            num_scalar_prefetch=0,
            grid=grid,
            in_specs=[
                pl.BlockSpec((tm, d), lambda i, j, k: (i, 0)),   # anchor rows
                pl.BlockSpec((tn, d), lambda i, j, k: (j, 0)),   # positive rows
                pl.BlockSpec((tk, d), lambda i, j, k: (k, 0)),   # negative rows
                pl.BlockSpec((tm, 1), lambda i, j, k: (i, 0)),   # anchor labels
                pl.BlockSpec((1, tn), lambda i, j, k: (0, j)),   # positive labels
                pl.BlockSpec((1, tk), lambda i, j, k: (0, k)),   # negative labels
            ],
            out_specs=pl.BlockSpec((tm, 1), lambda i, j, k: (i, 0)),
            scratch_shapes=[
                pltpu.VMEM((tm, tn), jnp.float32),               # S[a,p] accumulator
                pltpu.VMEM((nk, tm, tk), jnp.bfloat16),          # cached w per anchor tile
            ],
        ),
        compiler_params=pltpu.CompilerParams(
            dimension_semantics=("parallel", "arbitrary", "arbitrary"),
            vmem_limit_bytes=vmem_limit),
    )(x_bf16, x_bf16, x_bf16, labels_col, labels_row, labels_row)

    total = jnp.sum(per_anchor)     # = sum_t exp(E_t - shift), >= 0
    # loss = log(1 + sum exp(E)) = logaddexp(0, shift + log(sum exp(E - shift)));
    # total == 0 (no triplets) -> log(0) = -inf -> loss = 0, matching the module.
    # TODO(synk): ops.logsumexp(exponent, add_one=True, dim=0) is assumed to mean
    # log(1 + sum(exp(exponent))); adjust here if cortex's op differs.
    return jnp.logaddexp(0.0, shift + jnp.log(total))


def angular_loss_ref(embeds, labels, margin=45.0):
    """Pure-JAX reference mirroring the PyTorch forward at triplet granularity."""
    x = embeds.astype(jnp.float32)
    x = x / jnp.maximum(jnp.linalg.norm(x, axis=1, keepdims=True), 1e-12)
    n = x.shape[0]
    sim = x @ x.T
    eq = labels[:, None] == labels[None, :]
    pos = eq & ~jnp.eye(n, dtype=bool)            # (a, p)
    neg = ~eq                                     # (a, n)
    t2 = math.tan(math.radians(float(margin))) ** 2
    expo = (4.0 * t2) * (sim[:, None, :] + sim[None, :, :]) \
        - (2.0 * (1.0 + t2)) * sim[:, :, None]    # (a, p, n)
    mask = pos[:, :, None] & neg[:, None, :]
    total = jnp.sum(jnp.where(mask, jnp.exp(expo), 0.0))
    return jnp.log1p(total)


if __name__ == "__main__":
    key = jax.random.PRNGKey(0)
    k1, k2 = jax.random.split(key)

    # small case: single-tile grid (N padded 8 -> 16)
    N, D = 8, 32
    embeds = jax.random.normal(k1, (N, D), dtype=jnp.float32)
    labels = jnp.array([0, 0, 1, 1, 2, 2, 3, 3], dtype=jnp.int32)
    loss = angular_loss(embeds, labels)
    jax.block_until_ready(loss)
    ref = angular_loss_ref(embeds, labels)
    assert jnp.abs(loss - ref) < 2e-2 * (1.0 + jnp.abs(ref)), (loss, ref)

    # larger case with an explicit small tile: exercises the 2x2x2 grid, the padding
    # (160 -> 256, label -1) masking, and the cross-j reuse of the w cache.
    N2, D2 = 160, 32
    embeds2 = jax.random.normal(k2, (N2, D2), dtype=jnp.float32)
    labels2 = jnp.arange(N2, dtype=jnp.int32) % 10
    loss2 = angular_loss(embeds2, labels2, tile=128)
    jax.block_until_ready(loss2)
    ref2 = angular_loss_ref(embeds2, labels2)
    assert jnp.abs(loss2 - ref2) < 2e-2 * (1.0 + jnp.abs(ref2)), (loss2, ref2)

    # same inputs through the default (single 160x160 tile) fast path
    loss3 = angular_loss(embeds2, labels2)
    jax.block_until_ready(loss3)
    assert jnp.abs(loss3 - ref2) < 2e-2 * (1.0 + jnp.abs(ref2)), (loss3, ref2)

    print("KERNEL_OK")
</pallas_src>

<mosaic_0001>
module attributes {stable_mosaic.version = 11 : i64} {
  func.func @_angular_kernel(%arg0: i32, %arg1: i32, %arg2: i32, %arg3: memref<16x32xbf16, #tpu.memory_space<vmem>>, %arg4: memref<16x32xbf16, #tpu.memory_space<vmem>>, %arg5: memref<16x32xbf16, #tpu.memory_space<vmem>>, %arg6: memref<16x1xi32, #tpu.memory_space<vmem>>, %arg7: memref<1x16xi32, #tpu.memory_space<vmem>>, %arg8: memref<1x16xi32, #tpu.memory_space<vmem>>, %arg9: memref<16x1xf32, #tpu.memory_space<vmem>>, %arg10: memref<16x16xf32, #tpu.memory_space<vmem>>, %arg11: memref<1x16x16xbf16, #tpu.memory_space<vmem>>) attributes {dimension_semantics = [#tpu.dimension_semantics<parallel>, #tpu.dimension_semantics<arbitrary>, #tpu.dimension_semantics<arbitrary>], iteration_bounds = array<i64: 1, 1, 1>, scalar_prefetch = 0 : i64, scratch_operands = 2 : i64, tpu.core_type = #tpu.core_type<tc>, window_params = [{transform_indices = @transform_0, window_bounds = array<i64: 16, 32>}, {transform_indices = @transform_1, window_bounds = array<i64: 16, 32>}, {transform_indices = @transform_2, window_bounds = array<i64: 16, 32>}, {transform_indices = @transform_3, window_bounds = array<i64: 16, 1>}, {transform_indices = @transform_4, window_bounds = array<i64: 1, 16>}, {transform_indices = @transform_5, window_bounds = array<i64: 1, 16>}, {transform_indices = @transform_6, window_bounds = array<i64: 16, 1>}]} {
    %c0_i32 = arith.constant 0 : i32
    %0 = arith.cmpi eq, %arg1, %c0_i32 : i32
    %c0_i32_0 = arith.constant 0 : i32
    %1 = arith.cmpi eq, %arg2, %c0_i32_0 : i32
    %2 = arith.andi %0, %1 : i1
    %3 = arith.extui %2 : i1 to i32
    %c0_i32_1 = arith.constant 0 : i32
    %4 = arith.cmpi ne, %3, %c0_i32_1 : i32
    scf.if %4 {
      %cst_22 = arith.constant 0.000000e+00 : f32
      %31 = vector.broadcast %cst_22 : f32 to vector<16x1xf32>
      %c0_23 = arith.constant 0 : index
      %c0_24 = arith.constant 0 : index
      %32 = vector.load %arg9[%c0_23, %c0_24] : memref<16x1xf32, #tpu.memory_space<vmem>>, vector<16x1xf32>
      tpu.vector_store %arg9[%c0_23, %c0_24], %31 {strides = array<i32>} : memref<16x1xf32, #tpu.memory_space<vmem>>, vector<16x1xf32>,
    } else {
    }
    %c0_i32_2 = arith.constant 0 : i32
    %5 = arith.cmpi eq, %arg2, %c0_i32_2 : i32
    %6 = arith.extui %5 : i1 to i32
    %c0_i32_3 = arith.constant 0 : i32
    %7 = arith.cmpi ne, %6, %c0_i32_3 : i32
    scf.if %7 {
      %cst_22 = arith.constant 0.000000e+00 : f32
      %31 = vector.broadcast %cst_22 : f32 to vector<16x16xf32>
      %c0_23 = arith.constant 0 : index
      %c0_24 = arith.constant 0 : index
      %32 = vector.load %arg10[%c0_23, %c0_24] : memref<16x16xf32, #tpu.memory_space<vmem>>, vector<16x16xf32>
      tpu.vector_store %arg10[%c0_23, %c0_24], %31 {strides = array<i32>} : memref<16x16xf32, #tpu.memory_space<vmem>>, vector<16x16xf32>,
    } else {
    }
    %c0 = arith.constant 0 : index
    %c0_4 = arith.constant 0 : index
    %8 = vector.load %arg6[%c0, %c0_4] : memref<16x1xi32, #tpu.memory_space<vmem>>, vector<16x1xi32>
    %c0_5 = arith.constant 0 : index
    %c0_6 = arith.constant 0 : index
    %9 = vector.load %arg4[%c0_5, %c0_6] : memref<16x32xbf16, #tpu.memory_space<vmem>>, vector<16x32xbf16>
    %c0_7 = arith.constant 0 : index
    %c0_8 = arith.constant 0 : index
    %10 = vector.load %arg5[%c0_7, %c0_8] : memref<16x32xbf16, #tpu.memory_space<vmem>>, vector<16x32xbf16>
    %c0_i32_9 = arith.constant 0 : i32
    %11 = arith.cmpi eq, %arg1, %c0_i32_9 : i32
    %12 = arith.extui %11 : i1 to i32
    %c0_i32_10 = arith.constant 0 : i32
    %13 = arith.cmpi ne, %12, %c0_i32_10 : i32
    scf.if %13 {
      %c0_22 = arith.constant 0 : index
      %c0_23 = arith.constant 0 : index
      %31 = vector.load %arg8[%c0_22, %c0_23] : memref<1x16xi32, #tpu.memory_space<vmem>>, vector<1x16xi32>
      %c0_24 = arith.constant 0 : index
      %c0_25 = arith.constant 0 : index
      %32 = vector.load %arg3[%c0_24, %c0_25] : memref<16x32xbf16, #tpu.memory_space<vmem>>, vector<16x32xbf16>
      %cst_26 = arith.constant dense<0.000000e+00> : vector<16x16xf32>
      %33 = tpu.matmul %32, %10, %cst_26 {dimension_numbers = #tpu.dot_dimension_numbers<[1], [1], [0], [0], [0, 0, 1, 0], [], []>} : vector<16x32xbf16>, vector<16x32xbf16>, vector<16x16xf32> -> vector<16x16xf32>
      %34 = vector.broadcast %8 : vector<16x1xi32> to vector<16x16xi32>
      %35 = vector.broadcast %31 : vector<1x16xi32> to vector<16x16xi32>
      %36 = arith.cmpi ne, %34, %35 : vector<16x16xi32>
      %c0_i32_27 = arith.constant 0 : i32
      %37 = vector.broadcast %c0_i32_27 : i32 to vector<16x1xi32>
      %38 = arith.cmpi sge, %8, %37 : vector<16x1xi32>
      %c0_i32_28 = arith.constant 0 : i32
      %39 = vector.broadcast %c0_i32_28 : i32 to vector<1x16xi32>
      %40 = arith.cmpi sge, %31, %39 : vector<1x16xi32>
      %41 = vector.broadcast %38 : vector<16x1xi1> to vector<16x16xi1>
      %42 = vector.broadcast %40 : vector<1x16xi1> to vector<16x16xi1>
      %43 = arith.andi %41, %42 : vector<16x16xi1>
      %44 = arith.andi %36, %43 : vector<16x16xi1>
      %cst_29 = arith.constant 1.000000e+00 : f32
      %45 = vector.broadcast %cst_29 : f32 to vector<16x16xf32>
      %46 = arith.subf %33, %45 : vector<16x16xf32>
      %cst_30 = arith.constant 4.000000e+00 : f32
      %47 = vector.broadcast %cst_30 : f32 to vector<16x16xf32>
      %48 = arith.mulf %47, %46 : vector<16x16xf32>
      %49 = math.exp %48 : vector<16x16xf32>
      %cst_31 = arith.constant 0.000000e+00 : f32
      %50 = vector.broadcast %cst_31 : f32 to vector<16x16xf32>
      %51 = arith.select %44, %49, %50 : vector<16x16xi1>, vector<16x16xf32>
      %52 = arith.truncf %51 : vector<16x16xf32> to vector<16x16xbf16>
      %53 = arith.index_cast %arg2 : i32 to index
      %c0_32 = arith.constant 0 : index
      %c0_33 = arith.constant 0 : index
      %54 = vector.load %arg11[%53, %c0_32, %c0_33] : memref<1x16x16xbf16, #tpu.memory_space<vmem>>, vector<1x16x16xbf16>
      %55 = vector.shape_cast %54 : vector<1x16x16xbf16> to vector<16x16xbf16>
      %56 = vector.shape_cast %52 : vector<16x16xbf16> to vector<1x16x16xbf16>
      tpu.vector_store %arg11[%53, %c0_32, %c0_33], %56 {strides = array<i32>} : memref<1x16x16xbf16, #tpu.memory_space<vmem>>, vector<1x16x16xbf16>,
    } else {
    }
    %14 = arith.index_cast %arg2 : i32 to index
    %c0_11 = arith.constant 0 : index
    %c0_12 = arith.constant 0 : index
    %15 = vector.load %arg11[%14, %c0_11, %c0_12] : memref<1x16x16xbf16, #tpu.memory_space<vmem>>, vector<1x16x16xbf16>
    %16 = vector.shape_cast %15 : vector<1x16x16xbf16> to vector<16x16xbf16>
    %cst = arith.constant dense<0.000000e+00> : vector<16x16xf32>
    %17 = tpu.matmul %9, %10, %cst {dimension_numbers = #tpu.dot_dimension_numbers<[1], [1], [0], [0], [0, 0, 1, 0], [], []>} : vector<16x32xbf16>, vector<16x32xbf16>, vector<16x16xf32> -> vector<16x16xf32>
    %cst_13 = arith.constant 1.000000e+00 : f32
    %18 = vector.broadcast %cst_13 : f32 to vector<16x16xf32>
    %19 = arith.subf %17, %18 : vector<16x16xf32>
    %cst_14 = arith.constant 4.000000e+00 : f32
    %20 = vector.broadcast %cst_14 : f32 to vector<16x16xf32>
    %21 = arith.mulf %20, %19 : vector<16x16xf32>
    %22 = math.exp %21 : vector<16x16xf32>
    %23 = arith.truncf %22 : vector<16x16xf32> to vector<16x16xbf16>
    %c0_15 = arith.constant 0 : index
    %c0_16 = arith.constant 0 : index
    %24 = vector.load %arg10[%c0_15, %c0_16] : memref<16x16xf32, #tpu.memory_space<vmem>>, vector<16x16xf32>
    %cst_17 = arith.constant dense<0.000000e+00> : vector<16x16xf32>
    %25 = tpu.matmul %16, %23, %cst_17 {dimension_numbers = #tpu.dot_dimension_numbers<[1], [1], [0], [0], [0, 0, 1, 0], [], []>} : vector<16x16xbf16>, vector<16x16xbf16>, vector<16x16xf32> -> vector<16x16xf32>
    %26 = arith.addf %24, %25 : vector<16x16xf32>
    %c0_18 = arith.constant 0 : index
    %c0_19 = arith.constant 0 : index
    %27 = vector.load %arg10[%c0_18, %c0_19] : memref<16x16xf32, #tpu.memory_space<vmem>>, vector<16x16xf32>
    tpu.vector_store %arg10[%c0_18, %c0_19], %26 {strides = array<i32>} : memref<16x16xf32, #tpu.memory_space<vmem>>, vector<16x16xf32>,
    %c0_i32_20 = arith.constant 0 : i32
    %28 = arith.cmpi eq, %arg2, %c0_i32_20 : i32
    %29 = arith.extui %28 : i1 to i32
    %c0_i32_21 = arith.constant 0 : i32
    %30 = arith.cmpi ne, %29, %c0_i32_21 : i32
    scf.if %30 {
      %c0_22 = arith.constant 0 : index
      %c0_23 = arith.constant 0 : index
      %31 = vector.load %arg7[%c0_22, %c0_23] : memref<1x16xi32, #tpu.memory_space<vmem>>, vector<1x16xi32>
      %c0_24 = arith.constant 0 : index
      %c0_25 = arith.constant 0 : index
      %32 = vector.load %arg3[%c0_24, %c0_25] : memref<16x32xbf16, #tpu.memory_space<vmem>>, vector<16x32xbf16>
      %cst_26 = arith.constant dense<0.000000e+00> : vector<16x16xf32>
      %33 = tpu.matmul %32, %9, %cst_26 {dimension_numbers = #tpu.dot_dimension_numbers<[1], [1], [0], [0], [0, 0, 1, 0], [], []>} : vector<16x32xbf16>, vector<16x32xbf16>, vector<16x16xf32> -> vector<16x16xf32>
      %c16_i32 = arith.constant 16 : i32
      %34 = arith.muli %arg0, %c16_i32 : i32
      %35 = tpu.iota {dimensions = array<i32: 0>} : vector<16x16xi32>
      %36 = vector.broadcast %34 : i32 to vector<16x16xi32>
      %37 = arith.addi %36, %35 : vector<16x16xi32>
      %c16_i32_27 = arith.constant 16 : i32
      %38 = arith.muli %arg1, %c16_i32_27 : i32
      %39 = tpu.iota {dimensions = array<i32: 1>} : vector<16x16xi32>
      %40 = vector.broadcast %38 : i32 to vector<16x16xi32>
      %41 = arith.addi %40, %39 : vector<16x16xi32>
      %42 = vector.broadcast %8 : vector<16x1xi32> to vector<16x16xi32>
      %43 = vector.broadcast %31 : vector<1x16xi32> to vector<16x16xi32>
      %44 = arith.cmpi eq, %42, %43 : vector<16x16xi32>
      %c0_i32_28 = arith.constant 0 : i32
      %45 = vector.broadcast %c0_i32_28 : i32 to vector<16x1xi32>
      %46 = arith.cmpi sge, %8, %45 : vector<16x1xi32>
      %47 = arith.cmpi ne, %37, %41 : vector<16x16xi32>
      %48 = vector.broadcast %46 : vector<16x1xi1> to vector<16x16xi1>
      %49 = arith.andi %48, %47 : vector<16x16xi1>
      %50 = arith.andi %44, %49 : vector<16x16xi1>
      %cst_29 = arith.constant 1.000000e+00 : f32
      %51 = vector.broadcast %cst_29 : f32 to vector<16x16xf32>
      %52 = arith.addf %33, %51 : vector<16x16xf32>
      %cst_30 = arith.constant -4.000000e+00 : f32
      %53 = vector.broadcast %cst_30 : f32 to vector<16x16xf32>
      %54 = arith.mulf %53, %52 : vector<16x16xf32>
      %55 = math.exp %54 : vector<16x16xf32>
      %c0_31 = arith.constant 0 : index
      %c0_32 = arith.constant 0 : index
      %56 = vector.load %arg10[%c0_31, %c0_32] : memref<16x16xf32, #tpu.memory_space<vmem>>, vector<16x16xf32>
      %57 = arith.mulf %55, %56 : vector<16x16xf32>
      %cst_33 = arith.constant 0.000000e+00 : f32
      %58 = vector.broadcast %cst_33 : f32 to vector<16x16xf32>
      %59 = arith.select %50, %57, %58 : vector<16x16xi1>, vector<16x16xf32>
      %c0_34 = arith.constant 0 : index
      %c0_35 = arith.constant 0 : index
      %60 = vector.load %arg9[%c0_34, %c0_35] : memref<16x1xf32, #tpu.memory_space<vmem>>, vector<16x1xf32>
      %cst_36 = arith.constant dense<0.000000e+00> : vector<16xf32>
      %61 = vector.multi_reduction <add>, %59, %cst_36 [1] : vector<16x16xf32> to vector<16xf32>
      %62 = vector.shape_cast %61 : vector<16xf32> to vector<16x1xf32>
      %63 = arith.addf %60, %62 : vector<16x1xf32>
      %c0_37 = arith.constant 0 : index
      %c0_38 = arith.constant 0 : index
      %64 = vector.load %arg9[%c0_37, %c0_38] : memref<16x1xf32, #tpu.memory_space<vmem>>, vector<16x1xf32>
      tpu.vector_store %arg9[%c0_37, %c0_38], %63 {strides = array<i32>} : memref<16x1xf32, #tpu.memory_space<vmem>>, vector<16x1xf32>,
    } else {
    }
    return
  }
  func.func @transform_0(%arg0: i32, %arg1: i32, %arg2: i32) -> (i32, i32) {
    %c0_i32 = arith.constant 0 : i32
    %c0_i32_0 = arith.constant 0 : i32
    return %arg0, %c0_i32 : i32, i32
  }
  func.func @transform_1(%arg0: i32, %arg1: i32, %arg2: i32) -> (i32, i32) {
    %c0_i32 = arith.constant 0 : i32
    %c0_i32_0 = arith.constant 0 : i32
    return %arg1, %c0_i32 : i32, i32
  }
  func.func @transform_2(%arg0: i32, %arg1: i32, %arg2: i32) -> (i32, i32) {
    %c0_i32 = arith.constant 0 : i32
    %c0_i32_0 = arith.constant 0 : i32
    return %arg2, %c0_i32 : i32, i32
  }
  func.func @transform_3(%arg0: i32, %arg1: i32, %arg2: i32) -> (i32, i32) {
    %c0_i32 = arith.constant 0 : i32
    %c0_i32_0 = arith.constant 0 : i32
    return %arg0, %c0_i32 : i32, i32
  }
  func.func @transform_4(%arg0: i32, %arg1: i32, %arg2: i32) -> (i32, i32) {
    %c0_i32 = arith.constant 0 : i32
    %c0_i32_0 = arith.constant 0 : i32
    return %c0_i32, %arg1 : i32, i32
  }
  func.func @transform_5(%arg0: i32, %arg1: i32, %arg2: i32) -> (i32, i32) {
    %c0_i32 = arith.constant 0 : i32
    %c0_i32_0 = arith.constant 0 : i32
    return %c0_i32, %arg2 : i32, i32
  }
  func.func @transform_6(%arg0: i32, %arg1: i32, %arg2: i32) -> (i32, i32) {
    %c0_i32 = arith.constant 0 : i32
    %c0_i32_0 = arith.constant 0 : i32
    return %arg0, %c0_i32 : i32, i32
  }
}

</mosaic_0001>

<llo_original>
// kernel: tpu_custom_call.1
$region0: #{tpu_custom_call.1}
  #allocation0 [shape = 'u32[]', space=smem, size = 0x4, offset = 0x4, fixed_abs, tag = 'smem constant byte address 0x4 - core index']
  #allocation1 [shape = 'u32[72,128]{1,0:T(1,128)}', space=vmem, size = 0x9000, scoped, tag = 'internal scratch']
  #allocation2 [shape = 'f32[16,16]{1,0:T(8,128)}', space=vmem, size = 0x2000, scoped, tag = 'scratch operand']
  #allocation3 [shape = 'bf16[1,16,16]{2,1,0:T(8,128)(2,1)}', space=vmem, size = 0x1000, scoped, tag = 'scratch operand']
  %s0 = inlined_call_operand.vmem [shape: bf16[16,32], index: 0, kind: input, shape index: {}]
  %s1 = inlined_call_operand.vmem [shape: bf16[16,32], index: 1, kind: input, shape index: {}]
  %s2 = inlined_call_operand.hbm [shape: bf16[16,32], index: 2, kind: input, shape index: {}]
  %s3 = inlined_call_operand.vmem [shape: s32[16,1], index: 3, kind: input, shape index: {}]
  %s4 = inlined_call_operand.vmem [shape: s32[1,16], index: 4, kind: input, shape index: {}]
  %s5 = inlined_call_operand.vmem [shape: s32[1,16], index: 5, kind: input, shape index: {}]
  %s6 = inlined_call_operand.vmem [shape: f32[16,1], index: 6, kind: output, shape index: {}]
  %s7 = sld [smem:[#allocation0]]
  $region54: #{tpu_custom_call.1} parent=0
    _
  %s9 = ssub.s32 1, %s7
  %s10 = scalar_select 0, %s9, %s7
  $region1: #{tpu_custom_call.1} parent=0
    #allocation4 [shape = 'u8[4096]{0}', space=vmem, size = 0x1000, scoped, tag = 'input window, operand 2, single buffered']
    #allocation5 [shape = 's32[1]{0}', space=sflag, size = 0x4, scoped, tag = 'scoped memory for tpu_custom_call.1']
    %11 = vsyncpa [#allocation5], 0
    // Predicated region
    $region2: #{tpu_custom_call.1} parent=1 // pred_check
      _
    $region3: #{tpu_custom_call.1} parent=1 // pred_check_branch
      %13 = sbr.rel (0) target = $region5
    $region4: #{tpu_custom_call.1} parent=1 // pred_region
      _
    $region5: #{tpu_custom_call.1} parent=1 // pred_fallthru
      _
    // Predicated region
    $region6: #{tpu_custom_call.1} parent=1 // pred_check
      _
    $region7: #{tpu_custom_call.1} parent=1 // pred_check_branch
      %15 = sbr.rel (0) target = $region9
    $region8: #{tpu_custom_call.1} parent=1 // pred_region
      _
    $region9: #{tpu_custom_call.1} parent=1 // pred_fallthru
      _
    // Predicated region
    $region10: #{tpu_custom_call.1} parent=1 // pred_check
      _
    $region11: #{tpu_custom_call.1} parent=1 // pred_check_branch
      %17 = sbr.rel (0) target = $region13
    $region12: #{tpu_custom_call.1} parent=1 // pred_region
      %19 = vsyncadd [#allocation5], 0
      %s20 = sshll.u32 %s2, 4
      %s21 = int_to_ptr.hbm [resolvable:$true] %s20
      %s22 = sshll.u32 [#allocation4], 4
      %s23 = int_to_ptr.vmem [resolvable:$true] %s22
      %28 = dma.hbm_to_vmem [thread:$0]  %s21, 128, %s23, [#allocation5], 64, 64, 4
    $region13: #{tpu_custom_call.1} parent=1 // pred_fallthru
      _
    // Predicated region
    $region14: #{tpu_custom_call.1} parent=1 // pred_check
      _
    $region15: #{tpu_custom_call.1} parent=1 // pred_check_branch
      %30 = sbr.rel (0) target = $region17
    $region16: #{tpu_custom_call.1} parent=1 // pred_region
      _
    $region17: #{tpu_custom_call.1} parent=1 // pred_fallthru
      _
    // Predicated region
    $region18: #{tpu_custom_call.1} parent=1 // pred_check
      _
    $region19: #{tpu_custom_call.1} parent=1 // pred_check_branch
      %32 = sbr.rel (0) target = $region21
    $region20: #{tpu_custom_call.1} parent=1 // pred_region
      _
    $region21: #{tpu_custom_call.1} parent=1 // pred_fallthru
      _
    // Predicated region
    $region22: #{tpu_custom_call.1} parent=1 // pred_check
      _
    $region23: #{tpu_custom_call.1} parent=1 // pred_check_branch
      %34 = sbr.rel (0) target = $region25
    $region24: #{tpu_custom_call.1} parent=1 // pred_region
      _
    $region25: #{tpu_custom_call.1} parent=1 // pred_fallthru
      _
    // Predicated region
    $region26: #{tpu_custom_call.1} parent=1 // pred_check
      _
    $region27: #{tpu_custom_call.1} parent=1 // pred_check_branch
      %36 = sbr.rel (0) target = $region29
    $region28: #{tpu_custom_call.1} parent=1 // pred_region
      %38 = dma.done [#allocation5], 128
    $region29: #{tpu_custom_call.1} parent=1 // pred_fallthru
      _
    %p40 = scmp.eq.s32.totalorder 0, 0
    %p41 = scmp.eq.s32.totalorder 0, 0
    %p42 = pnand %p40, %p41
    %p43 = pneg %p42
    // Predicated region
    $region30: #{tpu_custom_call.1} parent=1 // pred_check
      _
    $region31: #{tpu_custom_call.1} parent=1 // pred_check_branch
      %45 = sbr.rel (%p42) target = $region33
    $region32: #{tpu_custom_call.1} parent=1 // pred_region
      %vm46 = vcmask 7168
      %47 = vst.msk [vmem:[%s6] sm:$0xff] %vm46, 0.0
      %48 = vst.msk [vmem:[%s6 + $0x8] sm:$0xff] %vm46, 0.0
    $region33: #{tpu_custom_call.1} parent=1 // pred_fallthru
      _
    // Predicated region
    $region34: #{tpu_custom_call.1} parent=1 // pred_check
      %p49 = pneg %p41
    $region35: #{tpu_custom_call.1} parent=1 // pred_check_branch
      %51 = sbr.rel (%p49) target = $region37
    $region36: #{tpu_custom_call.1} parent=1 // pred_region
      %vm52 = vcmask 130048
      %53 = vst.msk [vmem:[#allocation2] sm:$0xff] %vm52, 0.0
      %54 = vst.msk [vmem:[#allocation2 + $0x8] sm:$0xff] %vm52, 0.0
    $region37: #{tpu_custom_call.1} parent=1 // pred_fallthru
      _
    %v55 = vld [vmem:[%s3] sm:$0xff]
    %v56 = vld [vmem:[%s3 + $0x8] sm:$0xff]
    %v57 = vld [vmem:[%s1] sm:$0xf]
    %v58 = vld [vmem:[%s1 + $0x4] sm:$0xf]
    %v59 = vld [vmem:[#allocation4] sm:$0xf]
    %v60 = vld [vmem:[#allocation4 + $0x4] sm:$0xf]
    // Predicated region
    $region38: #{tpu_custom_call.1} parent=1 // pred_check
      %p61 = pneg %p40
    $region39: #{tpu_custom_call.1} parent=1 // pred_check_branch
      %63 = sbr.rel (%p61) target = $region41
    $region40: #{tpu_custom_call.1} parent=1 // pred_region
      %v64 = vld [vmem:[%s5] sm:$0x1]
      %v65 = vld [vmem:[%s0] sm:$0xf]
      %v66 = vld [vmem:[%s0 + $0x4] sm:$0xf]
      %v69 = vunpack.c.l.b16 %v65
      %v70 = vunpack.c.l.b16 %v66
      %v71 = vpack.c.b16 %v70, %v69
      %v74 = vunpack.c.l.b16 %v59
      %v75 = vunpack.c.l.b16 %v60
      %v76 = vpack.c.b16 %v75, %v74
      %vm77 = vcmask 261120
      %v79 = vsel %vm77, %v71, 0
      %v82 = vsel %vm77, %v76, 0
      %84 = vmatpush.bf16.xpose.msra.mxu0 0
      %85 = vmatpush.bf16.xpose.msra.mxu0 0
      %86 = vmatpush.bf16.xpose.msra.mxu0 0
      %87 = vmatpush.bf16.xpose.msra.mxu0 0
      %88 = vmatpush.bf16.xpose.msra.mxu0 0
      %89 = vmatpush.bf16.xpose.msra.mxu0 0
      %90 = vmatpush.bf16.xpose.msra.mxu0 0
      %91 = vmatpush.bf16.xpose.msra.mxu0 %v82
      %92 = vmatmul.bf16.gmra.mxu0 %v79
      %v93 = vpop.f32.mrf.mxu0
      %v94 = vadd.f32 0.0, %v93
      %v95 = vpop.f32.mrf.mxu0
      %v96 = vadd.f32 0.0, %v95
      %97 = vdwg.mxu0
      %98 = vset.pattern.permute.xlu0 0
      %99 = vperm.xlu0 %98, %v55
      %v100 = vpop.permute.xlu0 %99
      %101 = vset.pattern.permute.xlu0 0
      %102 = vperm.xlu0 %101, %v56
      %v103 = vpop.permute.xlu0 %102
      %v104 = vperm.slane %v64, 0
      %vm105 = vcmp.ne.s32.totalorder %v100, %v104
      %vm106 = vcmp.ne.s32.totalorder %v103, %v104
      %vm107 = vcmp.ge.s32.totalorder %v55, 0
      %vm108 = vcmp.ge.s32.totalorder %v56, 0
      %vm109 = vcmp.ge.s32.totalorder %v64, 0
      %v110 = vsel %vm107, 1, 0
      %v111 = vsel %vm108, 1, 0
      %112 = vset.pattern.permute.xlu0 0
      %113 = vperm.xlu0 %112, %v110
      %v114 = vpop.permute.xlu0 %113
      %115 = vset.pattern.permute.xlu0 0
      %116 = vperm.xlu0 %115, %v111
      %v117 = vpop.permute.xlu0 %116
      %vm118 = vcmp.eq.s32.totalorder %v114, 1
      %vm119 = vcmp.eq.s32.totalorder %v117, 1
      %v120 = vsel %vm109, 1, 0
      %v121 = vperm.slane %v120, 0
      %vm122 = vcmp.eq.s32.totalorder %v121, 1
      %vm123 = vmand %vm118, %vm122
      %vm124 = vmand %vm119, %vm122
      %vm125 = vmand %vm105, %vm123
      %vm126 = vmand %vm106, %vm124
      %v127 = vsub.f32 %v94, 1.0
      %v128 = vsub.f32 %v96, 1.0
      %v129 = vmul.f32 %v127, 4.0
      %v130 = vmul.f32 %v128, 4.0
      %v131 = vmul.f32 %v129, 1.442695
      %v132 = vpow.pop %v131
      %v133 = vmul.f32 %v130, 1.442695
      %v134 = vpow.pop %v133
      %v135 = vsel %vm125, %v132, 0.0
      %v136 = vsel %vm126, %v134, 0.0
      %v137 = vpack.c.bf16 %v135, %v135
      %v138 = vpack.c.bf16 %v136, %v136
      %s139 = smul.u32 0, 2
      %s140 = smul.addr %s139, 4
      %s141 = scalar_lea.vmem [#allocation3], %s140
      %vm142 = vcmask 125952
      %143 = vst.msk [vmem:[%s141] sm:$0xf] %vm142, %v137
      %144 = vst.msk [vmem:[%s141 + $0x4] sm:$0xf] %vm142, %v138
    $region41: #{tpu_custom_call.1} parent=1 // pred_fallthru
      _
    %s145 = smul.u32 0, 2
    %s146 = smul.addr %s145, 4
    %s147 = scalar_lea.vmem [#allocation3], %s146
    %v148 = vld [vmem:[%s147] sm:$0xf]
    %v149 = vld [vmem:[%s147 + $0x4] sm:$0xf]
    %v152 = vunpack.c.l.b16 %v57
    %v153 = vunpack.c.l.b16 %v58
    %v154 = vpack.c.b16 %v153, %v152
    %v157 = vunpack.c.l.b16 %v59
    %v158 = vunpack.c.l.b16 %v60
    %v159 = vpack.c.b16 %v158, %v157
    %vm160 = vcmask 261120
    %v162 = vsel %vm160, %v154, 0
    %v165 = vsel %vm160, %v159, 0
    %167 = vmatpush.bf16.xpose.msra.mxu0 0
    %168 = vmatpush.bf16.xpose.msra.mxu0 0
    %169 = vmatpush.bf16.xpose.msra.mxu0 0
    %170 = vmatpush.bf16.xpose.msra.mxu0 0
    %171 = vmatpush.bf16.xpose.msra.mxu0 0
    %172 = vmatpush.bf16.xpose.msra.mxu0 0
    %173 = vmatpush.bf16.xpose.msra.mxu0 0
    %174 = vmatpush.bf16.xpose.msra.mxu0 %v165
    %175 = vmatmul.bf16.gmra.mxu0 %v162
    %v176 = vpop.f32.mrf.mxu0
    %v177 = vadd.f32 0.0, %v176
    %v178 = vpop.f32.mrf.mxu0
    %v179 = vadd.f32 0.0, %v178
    %180 = vdwg.mxu0
    %v181 = vsub.f32 %v177, 1.0
    %v182 = vsub.f32 %v179, 1.0
    %v183 = vmul.f32 %v181, 4.0
    %v184 = vmul.f32 %v182, 4.0
    %v185 = vmul.f32 %v183, 1.442695
    %v186 = vpow.pop %v185
    %v187 = vmul.f32 %v184, 1.442695
    %v188 = vpow.pop %v187
    %v189 = vpack.c.bf16 %v188, %v186
    %v190 = vld [vmem:[#allocation2] sm:$0xff]
    %v191 = vld [vmem:[#allocation2 + $0x8] sm:$0xff]
    %v194 = vunpack.c.l.b16 %v148
    %v195 = vunpack.c.l.b16 %v149
    %v196 = vpack.c.b16 %v195, %v194
    %vm197 = vcmask 130048
    %v199 = vsel %vm197, %v196, 0
    %v202 = vsel %vm197, %v189, 0
    %204 = vmatpush.bf16.xpose.msra.mxu0 0
    %205 = vmatpush.bf16.xpose.msra.mxu0 0
    %206 = vmatpush.bf16.xpose.msra.mxu0 0
    %207 = vmatpush.bf16.xpose.msra.mxu0 0
    %208 = vmatpush.bf16.xpose.msra.mxu0 0
    %209 = vmatpush.bf16.xpose.msra.mxu0 0
    %210 = vmatpush.bf16.xpose.msra.mxu0 0
    %211 = vmatpush.bf16.xpose.msra.mxu0 %v202
    %212 = vmatmul.bf16.gmra.mxu0 %v199
    %v213 = vpop.f32.mrf.mxu0
    %v214 = vadd.f32 0.0, %v213
    %v215 = vpop.f32.mrf.mxu0
    %v216 = vadd.f32 0.0, %v215
    %217 = vdwg.mxu0
    %v218 = vadd.f32 %v190, %v214
    %v219 = vadd.f32 %v191, %v216
    %220 = vst.msk [vmem:[#allocation2] sm:$0xff] %vm197, %v218
    %221 = vst.msk [vmem:[#allocation2 + $0x8] sm:$0xff] %vm197, %v219
    // Predicated region
    $region42: #{tpu_custom_call.1} parent=1 // pred_check
      %p222 = pneg %p41
    $region43: #{tpu_custom_call.1} parent=1 // pred_check_branch
      %224 = sbr.rel (%p222) target = $region45
    $region44: #{tpu_custom_call.1} parent=1 // pred_region
      %v225 = vld [vmem:[%s4] sm:$0x1]
      %v226 = vld [vmem:[%s0] sm:$0xf]
      %v227 = vld [vmem:[%s0 + $0x4] sm:$0xf]
      %s228 = smul.u32 0, 16
      %v229 = vlaneseq
      %v230 = vshrl.u32 %v229, 7
      %v231 = vadd.s32 %v230, 8
      %v232 = vstv %s228
      %v233 = vadd.s32 %v232, %v230
      %v234 = vadd.s32 %v232, %v231
      %s235 = smul.u32 0, 16
      %v236 = vlaneseq
      %v237 = vand.u32 %v236, 127
      %v238 = vstv %s235
      %v239 = vadd.s32 %v238, %v237
      %240 = vset.pattern.permute.xlu0 0
      %241 = vperm.xlu0 %240, %v55
      %v242 = vpop.permute.xlu0 %241
      %243 = vset.pattern.permute.xlu0 0
      %244 = vperm.xlu0 %243, %v56
      %v245 = vpop.permute.xlu0 %244
      %v246 = vperm.slane %v225, 0
      %vm247 = vcmp.eq.s32.totalorder %v242, %v246
      %vm248 = vcmp.eq.s32.totalorder %v245, %v246
      %vm249 = vcmp.ge.s32.totalorder %v55, 0
      %vm250 = vcmp.ge.s32.totalorder %v56, 0
      %vm251 = vcmp.ne.s32.totalorder %v233, %v239
      %vm252 = vcmp.ne.s32.totalorder %v234, %v239
      %v253 = vsel %vm249, 1, 0
      %v254 = vsel %vm250, 1, 0
      %255 = vset.pattern.permute.xlu0 0
      %256 = vperm.xlu0 %255, %v253
      %v257 = vpop.permute.xlu0 %256
      %258 = vset.pattern.permute.xlu0 0
      %259 = vperm.xlu0 %258, %v254
      %v260 = vpop.permute.xlu0 %259
      %vm261 = vcmp.eq.s32.totalorder %v257, 1
      %vm262 = vcmp.eq.s32.totalorder %v260, 1
      %vm263 = vmand %vm261, %vm251
      %vm264 = vmand %vm262, %vm252
      %vm265 = vmand %vm247, %vm263
      %vm266 = vmand %vm248, %vm264
      %v269 = vunpack.c.l.b16 %v226
      %v270 = vunpack.c.l.b16 %v227
      %v271 = vpack.c.b16 %v270, %v269
      %v273 = vsel %vm160, %v271, 0
      %275 = vmatpush.bf16.xpose.msra.mxu0 0
      %276 = vmatpush.bf16.xpose.msra.mxu0 0
      %277 = vmatpush.bf16.xpose.msra.mxu0 0
      %278 = vmatpush.bf16.xpose.msra.mxu0 0
      %279 = vmatpush.bf16.xpose.msra.mxu0 0
      %280 = vmatpush.bf16.xpose.msra.mxu0 0
      %281 = vmatpush.bf16.xpose.msra.mxu0 0
      %282 = vmatpush.bf16.xpose.msra.mxu0 %v162
      %283 = vmatmul.bf16.gmra.mxu0 %v273
      %v284 = vpop.f32.mrf.mxu0
      %v285 = vadd.f32 1.0, %v284
      %v286 = vpop.f32.mrf.mxu0
      %v287 = vadd.f32 1.0, %v286
      %288 = vdwg.mxu0
      %v289 = vmul.f32 %v285, -4.0
      %v290 = vmul.f32 %v287, -4.0
      %v291 = vmul.f32 %v289, 1.442695
      %v292 = vpow.pop %v291
      %v293 = vmul.f32 %v290, 1.442695
      %v294 = vpow.pop %v293
      %v295 = vld [vmem:[#allocation2] sm:$0xff]
      %v296 = vld [vmem:[#allocation2 + $0x8] sm:$0xff]
      %v297 = vmul.f32 %v292, %v295
      %v298 = vmul.f32 %v294, %v296
      %v299 = vsel %vm265, %v297, 0.0
      %v300 = vsel %vm266, %v298, 0.0
      %v301 = vld [vmem:[%s6] sm:$0xff]
      %v302 = vld [vmem:[%s6 + $0x8] sm:$0xff]
      %v303 = vsel %vm197, %v299, 0.0
      %304 = vadd.xlane.f32.xlu0 %v303
      %v305 = vpop.xlane.xlu0 %304
      %v306 = vsel %vm197, %v300, 0.0
      %307 = vadd.xlane.f32.xlu0 %v306
      %v308 = vpop.xlane.xlu0 %307
      %v309 = vadd.f32 %v301, %v305
      %v310 = vadd.f32 %v302, %v308
      %vm311 = vcmask 7168
      %312 = vst.msk [vmem:[%s6] sm:$0xff] %vm311, %v309
      %313 = vst.msk [vmem:[%s6 + $0x8] sm:$0xff] %vm311, %v310
    $region45: #{tpu_custom_call.1} parent=1 // pred_fallthru
      _
    // Predicated region
    $region46: #{tpu_custom_call.1} parent=1 // pred_check
      _
    $region47: #{tpu_custom_call.1} parent=1 // pred_check_branch
      %315 = sbr.rel (0) target = $region49
    $region48: #{tpu_custom_call.1} parent=1 // pred_region
      _
    $region49: #{tpu_custom_call.1} parent=1 // pred_fallthru
      _
    // Predicated region
    $region50: #{tpu_custom_call.1} parent=1 // pred_check
      _
    $region51: #{tpu_custom_call.1} parent=1 // pred_check_branch
      %317 = sbr.rel (0) target = $region53
    $region52: #{tpu_custom_call.1} parent=1 // pred_region
      _
    $region53: #{tpu_custom_call.1} parent=1 // pred_fallthru
      _
    %318 = vsyncpa [#allocation5], 1

</llo_original>
